<compile_context>
chip_gen: v7x
topology: tpu7x:2x2x1
jax: 0.10.0
libtpu: 0.0.40
codegen_flags: <defaults>
</compile_context>

<pallas_src>
import jax
import jax.numpy as jnp
from jax.experimental import pallas as pl
from jax.experimental.pallas import tpu as pltpu


def attention_kernel(x_ref, wt_ref, bw_ref, v_ref, bv_ref, ctx_ref, att_ref):
    # x_ref:   (TB, S, D)  TB batch rows per grid step
    # wt_ref:  (D, D)      W.weight^T (pre-transposed in the wrapper; f32 or bf16)
    # bw_ref:  (1, D)      W.bias (f32)
    # v_ref:   (1, D)      V.weight (f32)
    # bv_ref:  (1,)        V.bias (SMEM scalar, f32)
    # ctx_ref: (TB, S, D)  context output
    # att_ref: (TB, 1, S)  attention weights, lane-dense (S on the lane axis)
    TB, S, D = x_ref.shape

    x = x_ref[...]
    x2 = x.reshape(TB * S, D)
    lhs = x2 if wt_ref.dtype == x2.dtype else x2.astype(wt_ref.dtype)

    # hidden = tanh(x @ W^T + b_W) as ONE (TB*S, D) @ (D, D) MXU matmul.
    # W^T is pre-transposed in the wrapper, so this is a plain contraction —
    # no per-step vxpose of the grid-resident weight.
    # NOTE(v7x): tanh over the full tile is one EUP op per element; if a bundle
    # dump shows the single EUP slot binding, switch to the bf16 EUP path or a
    # VPU polynomial tanh.
    h = jnp.tanh(
        jnp.dot(lhs, wt_ref[...], preferred_element_type=jnp.float32)
        + bw_ref[...]
    )                                                            # (TB*S, D) f32

    # score = h . v + b_V : an N=1 MXU matmul would waste a full MXU pass, so
    # do it as a VPU multiply + lane (XLU) reduction.  Result is lane-major.
    hv = (h * v_ref[...]).reshape(TB, S, D)
    score = jnp.sum(hv, axis=-1) + bv_ref[0]                     # (TB, S) f32

    # softmax over the sequence axis (lane axis here)
    m = jnp.max(score, axis=-1, keepdims=True)                   # (TB, 1)
    e = jnp.exp(score - m)                                       # (TB, S)
    denom = jnp.sum(e, axis=-1, keepdims=True)                   # (TB, 1)
    # approx=False keeps full f32 accuracy for the 1e-5 reference check.
    attn = e * pl.reciprocal(denom, approx=False)                # (TB, S)

    # context = attention_weights * x (broadcast over the feature axis).
    # The attn[:, :, None] relayout and the score lane-reduction above are the
    # two XLU shuffles per step; only restructure if the bundle shows XLU as
    # the binding unit at production TB*S.
    ctx_ref[...] = (attn[:, :, None] * x).astype(ctx_ref.dtype)
    # lane-dense writeback: a (TB, 1, S) row, not an (S, 1) column.
    att_ref[...] = attn[:, None, :].astype(att_ref.dtype)


def _round_up(n, m):
    return ((n + m - 1) // m) * m


def _tpu_budget():
    """Returns (usable VMEM budget in bytes, number of TensorCores on the grid)."""
    vmem_phys = 64 * 1024 * 1024      # conservative floor == v7x per-TC physical
    num_cores = 1
    try:
        info = pltpu.get_tpu_info()
        vmem_phys = int(getattr(info, "vmem_capacity_bytes", vmem_phys))
        num_cores = int(getattr(info, "num_cores", num_cores))
    except Exception:
        pass
    try:
        kind = jax.devices()[0].device_kind.lower()
        if "v7" in kind:
            num_cores = max(num_cores, 2)
    except Exception:
        pass
    # ~25% headroom for Mosaic internal scratch / semaphores / compiler temps:
    # ≈48 MiB usable on v7x (64 MiB physical), ≈96 MiB on v5e/v6e (128 MiB).
    budget = min((vmem_phys * 3) // 4, 128 * 1024 * 1024)
    return budget, max(num_cores, 1)


def _pick_rows_per_step(B, S, D, *, vmem_budget, num_cores,
                        act_itemsize=4, weight_itemsize=4):
    """Largest batch tile TB (divisor of B) whose VMEM footprint fits the budget.

    The kernel is HBM-bandwidth-bound for small/medium D, so the only sizing
    goal is the biggest x/ctx tile that fits (no MXU-fill row cap).  Footprint
    counted (per the perf review): double-buffered x and ctx tiles, the
    sublane/lane-padded attention tile (double-buffered), the f32 hidden
    temporary plus one extra f32 compute temp, and the single-buffered resident
    weights W^T / b_W / v.
    """
    d_pad = _round_up(D, 128)
    s_pad8 = _round_up(S, 8)
    s_pad128 = _round_up(S, 128)

    fixed = D * d_pad * weight_itemsize            # W^T (single-buffered)
    fixed += 2 * 8 * d_pad * 4                     # b_W and v (padded rows, f32)

    def footprint(tb):
        xc_tile = tb * s_pad8 * d_pad * act_itemsize     # one x (or ctx) tile
        att_tile = tb * 8 * s_pad128 * act_itemsize      # padded (tb, 1, S) tile
        dma = 2 * (2 * xc_tile + att_tile)               # pipeline double-buffers
        temps = 2 * tb * s_pad8 * d_pad * 4              # h + one f32 compute temp
        return fixed + dma + temps

    fitting = []
    for tb in range(1, B + 1):
        if B % tb:
            continue
        steps = B // tb
        # Only multi-TC parts (v7x) need >= num_cores grid steps to keep every
        # core busy; on single-TC v5e/v6e this would just add per-step overhead.
        if num_cores > 1 and B >= num_cores and steps < num_cores:
            continue
        if footprint(tb) > vmem_budget:
            continue
        fitting.append(tb)

    if not fitting:
        # TODO(synk): tile the sequence axis with a two-pass / online softmax
        # when even a single batch row exceeds the VMEM budget (large S*D);
        # matters first on v7x's 64 MiB VMEM.
        return 1
    if num_cores > 1:
        balanced = [tb for tb in fitting if (B // tb) % num_cores == 0]
        if balanced:
            return max(balanced)
    return max(fitting)


def attention_layer(x, w_weight, w_bias, v_weight, v_bias, *,
                    rows_per_step=None, use_bf16_matmul=False):
    """x: (B, S, D). Returns (context_vector (B,S,D), attention_weights (B,S,1))."""
    B, S, D = x.shape
    vmem_budget, num_cores = _tpu_budget()
    weight_itemsize = 2 if use_bf16_matmul else 4
    tb = (rows_per_step if rows_per_step is not None
          else _pick_rows_per_step(
              B, S, D, vmem_budget=vmem_budget, num_cores=num_cores,
              act_itemsize=x.dtype.itemsize, weight_itemsize=weight_itemsize))
    assert B % tb == 0, "rows_per_step must divide the batch size"

    # Pre-transpose W once (one-off D^2 op) so the kernel never re-transposes
    # the grid-resident weight.
    wt = jnp.transpose(w_weight)                 # (D_in, D_out) == (D, D)
    if use_bf16_matmul:
        wt = wt.astype(jnp.bfloat16)             # halves W HBM traffic + VMEM
    bw = w_bias.reshape(1, D).astype(jnp.float32)
    vw = v_weight.reshape(1, D).astype(jnp.float32)
    bv = v_bias.reshape(1).astype(jnp.float32)   # -> SMEM scalar

    # TODO(synk): for production sequence lengths where one S block exceeds the
    # VMEM budget, tile S with a two-pass / online softmax (v7x hits this first).
    # TODO(synk): if production D < 128, fold the feature axis with S in the
    # wrapper (present ctx to the DMA as (tb, S*D)) to avoid masked vst.msk
    # partial stores; irrelevant when D >= 128.

    def build(single_buffer_weights):
        resident_kw = (dict(pipeline_mode=pl.Buffered(1))
                       if single_buffer_weights else {})
        grid_spec = pltpu.PrefetchScalarGridSpec(
            num_scalar_prefetch=0,
            grid=(B // tb,),
            in_specs=[
                pl.BlockSpec((tb, S, D), lambda b: (b, 0, 0)),             # x tile
                pl.BlockSpec((D, D), lambda b: (0, 0), **resident_kw),     # W^T
                pl.BlockSpec((1, D), lambda b: (0, 0), **resident_kw),     # W.bias
                pl.BlockSpec((1, D), lambda b: (0, 0), **resident_kw),     # V.weight
                pl.BlockSpec(memory_space=pltpu.MemorySpace.SMEM),         # V.bias
            ],
            out_specs=[
                pl.BlockSpec((tb, S, D), lambda b: (b, 0, 0)),             # context
                pl.BlockSpec((tb, 1, S), lambda b: (b, 0, 0)),             # attention
            ],
        )
        return pl.pallas_call(
            attention_kernel,
            out_shape=(
                jax.ShapeDtypeStruct((B, S, D), x.dtype),
                jax.ShapeDtypeStruct((B, 1, S), x.dtype),
            ),
            grid_spec=grid_spec,
            compiler_params=pltpu.CompilerParams(
                dimension_semantics=("parallel",),
                vmem_limit_bytes=vmem_budget,
            ),
        )

    try:
        ctx, attn_row = build(single_buffer_weights=True)(x, wt, bw, vw, bv)
    except Exception:
        # Fallback for JAX versions that reject pipeline_mode=pl.Buffered(1):
        # default double-buffering only costs extra VMEM for the weights.
        ctx, attn_row = build(single_buffer_weights=False)(x, wt, bw, vw, bv)

    # (B, 1, S) -> (B, S, 1): pure data-order-preserving reshape in the wrapper.
    return ctx, attn_row.reshape(B, S, 1)


def _reference(x, w_weight, w_bias, v_weight, v_bias):
    h = jnp.tanh(jnp.einsum("bsd,od->bso", x, w_weight) + w_bias)
    score = jnp.einsum("bsd,od->bso", h, v_weight) + v_bias          # (B, S, 1)
    attn = jax.nn.softmax(score, axis=1)
    return attn * x, attn


if __name__ == "__main__":
    # NOTE: these shapes are a correctness smoke test only — at B=2, S=8, D=32
    # the kernel is 100% per-step-overhead bound.  Tile-size conclusions must
    # be drawn from production-sized B/S/D with min-of-N xprof timings.
    B, S, D = 2, 8, 32
    key = jax.random.PRNGKey(0)
    kx, kw, kbw, kv, kbv = jax.random.split(key, 5)

    x = jax.random.normal(kx, (B, S, D), dtype=jnp.float32)

    # Deterministic parameter init (shapes match nn.Linear(D, D) and nn.Linear(D, 1))
    bound_w = 1.0 / jnp.sqrt(D)
    w_weight = jax.random.uniform(kw, (D, D), minval=-bound_w, maxval=bound_w, dtype=jnp.float32)
    w_bias = jax.random.uniform(kbw, (D,), minval=-bound_w, maxval=bound_w, dtype=jnp.float32)
    v_weight = jax.random.uniform(kv, (1, D), minval=-bound_w, maxval=bound_w, dtype=jnp.float32)
    v_bias = jax.random.uniform(kbv, (1,), minval=-bound_w, maxval=bound_w, dtype=jnp.float32)

    ctx, attn = attention_layer(x, w_weight, w_bias, v_weight, v_bias)
    jax.block_until_ready((ctx, attn))

    ctx_ref, attn_ref = _reference(x, w_weight, w_bias, v_weight, v_bias)
    assert jnp.allclose(ctx, ctx_ref, atol=1e-5, rtol=1e-5), "context mismatch"
    assert jnp.allclose(attn, attn_ref, atol=1e-5, rtol=1e-5), "attention mismatch"
    assert jnp.allclose(jnp.sum(attn, axis=1), 1.0, atol=1e-5), "softmax not normalized"

    print("KERNEL_OK")
</pallas_src>

<mosaic_0001>
module attributes {stable_mosaic.version = 11 : i64} {
  func.func @attention_kernel(%arg0: i32, %arg1: memref<2x8x32xf32, #tpu.memory_space<vmem>>, %arg2: memref<32x32xf32, #tpu.memory_space<vmem>>, %arg3: memref<1x32xf32, #tpu.memory_space<vmem>>, %arg4: memref<1x32xf32, #tpu.memory_space<vmem>>, %arg5: memref<1xf32, #tpu.memory_space<smem>>, %arg6: memref<2x8x32xf32, #tpu.memory_space<vmem>>, %arg7: memref<2x1x8xf32, #tpu.memory_space<vmem>>) attributes {dimension_semantics = [#tpu.dimension_semantics<parallel>], iteration_bounds = array<i64: 1>, scalar_prefetch = 0 : i64, scratch_operands = 0 : i64, tpu.core_type = #tpu.core_type<tc>, window_params = [{transform_indices = @transform_0, window_bounds = array<i64: 2, 8, 32>}, {pipeline_mode = #tpu.pipeline_mode<synchronous>, transform_indices = @transform_1, window_bounds = array<i64: 32, 32>}, {pipeline_mode = #tpu.pipeline_mode<synchronous>, transform_indices = @transform_2, window_bounds = array<i64: 1, 32>}, {pipeline_mode = #tpu.pipeline_mode<synchronous>, transform_indices = @transform_3, window_bounds = array<i64: 1, 32>}, {transform_indices = @transform_4, window_bounds = array<i64: 1>}, {transform_indices = @transform_5, window_bounds = array<i64: 2, 8, 32>}, {transform_indices = @transform_6, window_bounds = array<i64: 2, 1, 8>}]} {
    %c0 = arith.constant 0 : index
    %c0_0 = arith.constant 0 : index
    %c0_1 = arith.constant 0 : index
    %0 = vector.load %arg1[%c0, %c0_0, %c0_1] : memref<2x8x32xf32, #tpu.memory_space<vmem>>, vector<2x8x32xf32>
    %1 = vector.shape_cast %0 : vector<2x8x32xf32> to vector<16x32xf32>
    %c0_2 = arith.constant 0 : index
    %c0_3 = arith.constant 0 : index
    %2 = vector.load %arg2[%c0_2, %c0_3] : memref<32x32xf32, #tpu.memory_space<vmem>>, vector<32x32xf32>
    %cst = arith.constant dense<0.000000e+00> : vector<16x32xf32>
    %3 = tpu.matmul %1, %2, %cst {dimension_numbers = #tpu.dot_dimension_numbers<[1], [0], [0], [1], [0, 0, 1, 1], [], []>} : vector<16x32xf32>, vector<32x32xf32>, vector<16x32xf32> -> vector<16x32xf32>
    %c0_4 = arith.constant 0 : index
    %c0_5 = arith.constant 0 : index
    %4 = vector.load %arg3[%c0_4, %c0_5] : memref<1x32xf32, #tpu.memory_space<vmem>>, vector<1x32xf32>
    %5 = vector.broadcast %4 : vector<1x32xf32> to vector<16x32xf32>
    %6 = arith.addf %3, %5 : vector<16x32xf32>
    %7 = math.tanh %6 : vector<16x32xf32>
    %c0_6 = arith.constant 0 : index
    %c0_7 = arith.constant 0 : index
    %8 = vector.load %arg4[%c0_6, %c0_7] : memref<1x32xf32, #tpu.memory_space<vmem>>, vector<1x32xf32>
    %9 = vector.broadcast %8 : vector<1x32xf32> to vector<16x32xf32>
    %10 = arith.mulf %7, %9 : vector<16x32xf32>
    %11 = vector.shape_cast %10 : vector<16x32xf32> to vector<2x8x32xf32>
    %cst_8 = arith.constant dense<0.000000e+00> : vector<2x8xf32>
    %12 = vector.multi_reduction <add>, %11, %cst_8 [2] : vector<2x8x32xf32> to vector<2x8xf32>
    %c0_9 = arith.constant 0 : index
    %13 = memref.load %arg5[%c0_9] : memref<1xf32, #tpu.memory_space<smem>>
    %14 = vector.broadcast %13 : f32 to vector<2x8xf32>
    %15 = arith.addf %12, %14 : vector<2x8xf32>
    %cst_10 = arith.constant dense<0xFF800000> : vector<2xf32>
    %16 = vector.multi_reduction <maximumf>, %15, %cst_10 [1] : vector<2x8xf32> to vector<2xf32>
    %17 = vector.shape_cast %16 : vector<2xf32> to vector<2x1xf32>
    %18 = vector.broadcast %17 : vector<2x1xf32> to vector<2x8xf32>
    %19 = arith.subf %15, %18 : vector<2x8xf32>
    %20 = math.exp %19 : vector<2x8xf32>
    %cst_11 = arith.constant dense<0.000000e+00> : vector<2xf32>
    %21 = vector.multi_reduction <add>, %20, %cst_11 [1] : vector<2x8xf32> to vector<2xf32>
    %22 = vector.shape_cast %21 : vector<2xf32> to vector<2x1xf32>
    %23 = tpu.reciprocal %22 : vector<2x1xf32> -> vector<2x1xf32>
    %24 = vector.broadcast %23 : vector<2x1xf32> to vector<2x8xf32>
    %25 = arith.mulf %20, %24 : vector<2x8xf32>
    %26 = vector.shape_cast %25 : vector<2x8xf32> to vector<2x8x1xf32>
    %27 = vector.broadcast %26 : vector<2x8x1xf32> to vector<2x8x32xf32>
    %28 = arith.mulf %27, %0 : vector<2x8x32xf32>
    %c0_12 = arith.constant 0 : index
    %c0_13 = arith.constant 0 : index
    %c0_14 = arith.constant 0 : index
    %29 = vector.load %arg6[%c0_12, %c0_13, %c0_14] : memref<2x8x32xf32, #tpu.memory_space<vmem>>, vector<2x8x32xf32>
    tpu.vector_store %arg6[%c0_12, %c0_13, %c0_14], %28 {strides = array<i32>} : memref<2x8x32xf32, #tpu.memory_space<vmem>>, vector<2x8x32xf32>,
    %30 = vector.shape_cast %25 : vector<2x8xf32> to vector<2x1x8xf32>
    %c0_15 = arith.constant 0 : index
    %c0_16 = arith.constant 0 : index
    %c0_17 = arith.constant 0 : index
    %31 = vector.load %arg7[%c0_15, %c0_16, %c0_17] : memref<2x1x8xf32, #tpu.memory_space<vmem>>, vector<2x1x8xf32>
    tpu.vector_store %arg7[%c0_15, %c0_16, %c0_17], %30 {strides = array<i32>} : memref<2x1x8xf32, #tpu.memory_space<vmem>>, vector<2x1x8xf32>,
    return
  }
  func.func @transform_0(%arg0: i32) -> (i32, i32, i32) {
    %c0_i32 = arith.constant 0 : i32
    %c0_i32_0 = arith.constant 0 : i32
    %c0_i32_1 = arith.constant 0 : i32
    return %arg0, %c0_i32, %c0_i32_0 : i32, i32, i32
  }
  func.func @transform_1(%arg0: i32) -> (i32, i32) {
    %c0_i32 = arith.constant 0 : i32
    %c0_i32_0 = arith.constant 0 : i32
    %c0_i32_1 = arith.constant 0 : i32
    return %c0_i32, %c0_i32_0 : i32, i32
  }
  func.func @transform_2(%arg0: i32) -> (i32, i32) {
    %c0_i32 = arith.constant 0 : i32
    %c0_i32_0 = arith.constant 0 : i32
    %c0_i32_1 = arith.constant 0 : i32
    return %c0_i32, %c0_i32_0 : i32, i32
  }
  func.func @transform_3(%arg0: i32) -> (i32, i32) {
    %c0_i32 = arith.constant 0 : i32
    %c0_i32_0 = arith.constant 0 : i32
    %c0_i32_1 = arith.constant 0 : i32
    return %c0_i32, %c0_i32_0 : i32, i32
  }
  func.func @transform_4(%arg0: i32) -> i32 {
    %c0_i32 = arith.constant 0 : i32
    %c0_i32_0 = arith.constant 0 : i32
    return %c0_i32 : i32
  }
  func.func @transform_5(%arg0: i32) -> (i32, i32, i32) {
    %c0_i32 = arith.constant 0 : i32
    %c0_i32_0 = arith.constant 0 : i32
    %c0_i32_1 = arith.constant 0 : i32
    return %arg0, %c0_i32, %c0_i32_0 : i32, i32, i32
  }
  func.func @transform_6(%arg0: i32) -> (i32, i32, i32) {
    %c0_i32 = arith.constant 0 : i32
    %c0_i32_0 = arith.constant 0 : i32
    %c0_i32_1 = arith.constant 0 : i32
    return %arg0, %c0_i32, %c0_i32_0 : i32, i32, i32
  }
}

module attributes {stable_mosaic.version = 11 : i64} {
  func.func @attention_kernel(%arg0: i32, %arg1: memref<2x8x32xf32, #tpu.memory_space<vmem>>, %arg2: memref<32x32xf32, #tpu.memory_space<vmem>>, %arg3: memref<1x32xf32, #tpu.memory_space<vmem>>, %arg4: memref<1x32xf32, #tpu.memory_space<vmem>>, %arg5: memref<1xf32, #tpu.memory_space<smem>>, %arg6: memref<2x8x32xf32, #tpu.memory_space<vmem>>, %arg7: memref<2x1x8xf32, #tpu.memory_space<vmem>>) attributes {dimension_semantics = [#tpu.dimension_semantics<parallel>], iteration_bounds = array<i64: 1>, scalar_prefetch = 0 : i64, scratch_operands = 0 : i64, tpu.core_type = #tpu.core_type<tc>, window_params = [{transform_indices = @transform_0, window_bounds = array<i64: 2, 8, 32>}, {pipeline_mode = #tpu.pipeline_mode<synchronous>, transform_indices = @transform_1, window_bounds = array<i64: 32, 32>}, {pipeline_mode = #tpu.pipeline_mode<synchronous>, transform_indices = @transform_2, window_bounds = array<i64: 1, 32>}, {pipeline_mode = #tpu.pipeline_mode<synchronous>, transform_indices = @transform_3, window_bounds = array<i64: 1, 32>}, {transform_indices = @transform_4, window_bounds = array<i64: 1>}, {transform_indices = @transform_5, window_bounds = array<i64: 2, 8, 32>}, {transform_indices = @transform_6, window_bounds = array<i64: 2, 1, 8>}]} {
    %c0 = arith.constant 0 : index
    %c0_0 = arith.constant 0 : index
    %c0_1 = arith.constant 0 : index
    %0 = vector.load %arg1[%c0, %c0_0, %c0_1] : memref<2x8x32xf32, #tpu.memory_space<vmem>>, vector<2x8x32xf32>
    %1 = vector.shape_cast %0 : vector<2x8x32xf32> to vector<16x32xf32>
    %c0_2 = arith.constant 0 : index
    %c0_3 = arith.constant 0 : index
    %2 = vector.load %arg2[%c0_2, %c0_3] : memref<32x32xf32, #tpu.memory_space<vmem>>, vector<32x32xf32>
    %cst = arith.constant dense<0.000000e+00> : vector<16x32xf32>
    %3 = tpu.matmul %1, %2, %cst {dimension_numbers = #tpu.dot_dimension_numbers<[1], [0], [0], [1], [0, 0, 1, 1], [], []>} : vector<16x32xf32>, vector<32x32xf32>, vector<16x32xf32> -> vector<16x32xf32>
    %c0_4 = arith.constant 0 : index
    %c0_5 = arith.constant 0 : index
    %4 = vector.load %arg3[%c0_4, %c0_5] : memref<1x32xf32, #tpu.memory_space<vmem>>, vector<1x32xf32>
    %5 = vector.broadcast %4 : vector<1x32xf32> to vector<16x32xf32>
    %6 = arith.addf %3, %5 : vector<16x32xf32>
    %7 = math.tanh %6 : vector<16x32xf32>
    %c0_6 = arith.constant 0 : index
    %c0_7 = arith.constant 0 : index
    %8 = vector.load %arg4[%c0_6, %c0_7] : memref<1x32xf32, #tpu.memory_space<vmem>>, vector<1x32xf32>
    %9 = vector.broadcast %8 : vector<1x32xf32> to vector<16x32xf32>
    %10 = arith.mulf %7, %9 : vector<16x32xf32>
    %11 = vector.shape_cast %10 : vector<16x32xf32> to vector<2x8x32xf32>
    %cst_8 = arith.constant dense<0.000000e+00> : vector<2x8xf32>
    %12 = vector.multi_reduction <add>, %11, %cst_8 [2] : vector<2x8x32xf32> to vector<2x8xf32>
    %c0_9 = arith.constant 0 : index
    %13 = memref.load %arg5[%c0_9] : memref<1xf32, #tpu.memory_space<smem>>
    %14 = vector.broadcast %13 : f32 to vector<2x8xf32>
    %15 = arith.addf %12, %14 : vector<2x8xf32>
    %cst_10 = arith.constant dense<0xFF800000> : vector<2xf32>
    %16 = vector.multi_reduction <maximumf>, %15, %cst_10 [1] : vector<2x8xf32> to vector<2xf32>
    %17 = vector.shape_cast %16 : vector<2xf32> to vector<2x1xf32>
    %18 = vector.broadcast %17 : vector<2x1xf32> to vector<2x8xf32>
    %19 = arith.subf %15, %18 : vector<2x8xf32>
    %20 = math.exp %19 : vector<2x8xf32>
    %cst_11 = arith.constant dense<0.000000e+00> : vector<2xf32>
    %21 = vector.multi_reduction <add>, %20, %cst_11 [1] : vector<2x8xf32> to vector<2xf32>
    %22 = vector.shape_cast %21 : vector<2xf32> to vector<2x1xf32>
    %23 = tpu.reciprocal %22 : vector<2x1xf32> -> vector<2x1xf32>
    %24 = vector.broadcast %23 : vector<2x1xf32> to vector<2x8xf32>
    %25 = arith.mulf %20, %24 : vector<2x8xf32>
    %26 = vector.shape_cast %25 : vector<2x8xf32> to vector<2x8x1xf32>
    %27 = vector.broadcast %26 : vector<2x8x1xf32> to vector<2x8x32xf32>
    %28 = arith.mulf %27, %0 : vector<2x8x32xf32>
    %c0_12 = arith.constant 0 : index
    %c0_13 = arith.constant 0 : index
    %c0_14 = arith.constant 0 : index
    %29 = vector.load %arg6[%c0_12, %c0_13, %c0_14] : memref<2x8x32xf32, #tpu.memory_space<vmem>>, vector<2x8x32xf32>
    tpu.vector_store %arg6[%c0_12, %c0_13, %c0_14], %28 {strides = array<i32>} : memref<2x8x32xf32, #tpu.memory_space<vmem>>, vector<2x8x32xf32>,
    %30 = vector.shape_cast %25 : vector<2x8xf32> to vector<2x1x8xf32>
    %c0_15 = arith.constant 0 : index
    %c0_16 = arith.constant 0 : index
    %c0_17 = arith.constant 0 : index
    %31 = vector.load %arg7[%c0_15, %c0_16, %c0_17] : memref<2x1x8xf32, #tpu.memory_space<vmem>>, vector<2x1x8xf32>
    tpu.vector_store %arg7[%c0_15, %c0_16, %c0_17], %30 {strides = array<i32>} : memref<2x1x8xf32, #tpu.memory_space<vmem>>, vector<2x1x8xf32>,
    return
  }
  func.func @transform_0(%arg0: i32) -> (i32, i32, i32) {
    %c0_i32 = arith.constant 0 : i32
    %c0_i32_0 = arith.constant 0 : i32
    %c0_i32_1 = arith.constant 0 : i32
    return %arg0, %c0_i32, %c0_i32_0 : i32, i32, i32
  }
  func.func @transform_1(%arg0: i32) -> (i32, i32) {
    %c0_i32 = arith.constant 0 : i32
    %c0_i32_0 = arith.constant 0 : i32
    %c0_i32_1 = arith.constant 0 : i32
    return %c0_i32, %c0_i32_0 : i32, i32
  }
  func.func @transform_2(%arg0: i32) -> (i32, i32) {
    %c0_i32 = arith.constant 0 : i32
    %c0_i32_0 = arith.constant 0 : i32
    %c0_i32_1 = arith.constant 0 : i32
    return %c0_i32, %c0_i32_0 : i32, i32
  }
  func.func @transform_3(%arg0: i32) -> (i32, i32) {
    %c0_i32 = arith.constant 0 : i32
    %c0_i32_0 = arith.constant 0 : i32
    %c0_i32_1 = arith.constant 0 : i32
    return %c0_i32, %c0_i32_0 : i32, i32
  }
  func.func @transform_4(%arg0: i32) -> i32 {
    %c0_i32 = arith.constant 0 : i32
    %c0_i32_0 = arith.constant 0 : i32
    return %c0_i32 : i32
  }
  func.func @transform_5(%arg0: i32) -> (i32, i32, i32) {
    %c0_i32 = arith.constant 0 : i32
    %c0_i32_0 = arith.constant 0 : i32
    %c0_i32_1 = arith.constant 0 : i32
    return %arg0, %c0_i32, %c0_i32_0 : i32, i32, i32
  }
  func.func @transform_6(%arg0: i32) -> (i32, i32, i32) {
    %c0_i32 = arith.constant 0 : i32
    %c0_i32_0 = arith.constant 0 : i32
    %c0_i32_1 = arith.constant 0 : i32
    return %arg0, %c0_i32, %c0_i32_0 : i32, i32, i32
  }
}

</mosaic_0001>

<llo_original>
// kernel: tpu_custom_call.1
$region0: #{tpu_custom_call.1}
  #allocation0 [shape = 'u32[]', space=smem, size = 0x4, offset = 0x4, fixed_abs, tag = 'smem constant byte address 0x4 - core index']
  #allocation1 [shape = 'u32[144,128]{1,0:T(1,128)}', space=vmem, size = 0x12000, scoped, tag = 'internal scratch']
  #allocation2 [shape = 'f32[1]{0:T(128)S(6)}', space=smem, size = 0x200, scoped, tag = 'scoped memory for tpu_custom_call.1']
  %s0 = inlined_call_operand.hbm [shape: f32[2,8,32], index: 0, kind: input, shape index: {}]
  %s1 = inlined_call_operand.hbm [shape: f32[32,32], index: 1, kind: input, shape index: {}]
  %s2 = inlined_call_operand.vmem [shape: f32[1,32], index: 2, kind: input, shape index: {}]
  %s3 = inlined_call_operand.vmem [shape: f32[1,32], index: 3, kind: input, shape index: {}]
  %s4 = inlined_call_operand.<no memory space> [shape: f32[1], index: 4, kind: input, shape index: {}]
  %s5 = inlined_call_operand.hbm [shape: f32[2,8,32], index: 5, kind: output, shape index: {0}]
  %s6 = inlined_call_operand.hbm [shape: f32[2,1,8], index: 6, kind: output, shape index: {1}]
  %7 = xla_tuple %s5, %s6
  %s8 = sld [smem:[#allocation0]]
  $region46: #{tpu_custom_call.1} parent=0
    _
  %s10 = ssub.s32 1, %s8
  %s11 = scalar_select 0, %s10, %s8
  %12 = sst [smem:[#allocation2]] %s4
  $region1: #{tpu_custom_call.1} parent=0
    #allocation3 [shape = 'u8[8192]{0}', space=vmem, size = 0x2000, scoped, tag = 'input window, operand 0, single buffered']
    #allocation4 [shape = 's32[1]{0}', space=sflag, size = 0x4, scoped, tag = 'scoped memory for tpu_custom_call.1']
    #allocation5 [shape = 's32[1]{0}', space=sflag, size = 0x4, scoped, tag = 'scoped memory for tpu_custom_call.1']
    #allocation6 [shape = 'u8[16384]{0}', space=vmem, size = 0x4000, scoped, tag = 'input window, operand 1, single buffered']
    #allocation7 [shape = 's32[1]{0}', space=sflag, size = 0x4, scoped, tag = 'scoped memory for tpu_custom_call.1']
    #allocation8 [shape = 'u8[8192]{0}', space=vmem, size = 0x2000, scoped, tag = 'output window, operand 0, single buffered']
    #allocation9 [shape = 'u8[1024]{0}', space=vmem, size = 0x400, scoped, tag = 'output window, operand 1, single buffered']
    #allocation10 [shape = 's32[1]{0}', space=sflag, size = 0x4, scoped, tag = 'scoped memory for tpu_custom_call.1']
    %13 = vsyncpa [#allocation4], 0
    %14 = vsyncpa [#allocation7], 0
    %15 = vsyncpa [#allocation5], 0
    %16 = vsyncpa [#allocation10], 0
    // Predicated region
    $region2: #{tpu_custom_call.1} parent=1 // pred_check
      _
    $region3: #{tpu_custom_call.1} parent=1 // pred_check_branch
      %18 = sbr.rel (0) target = $region5
    $region4: #{tpu_custom_call.1} parent=1 // pred_region
      %s20 = ssub.s32 256, 256
      %21 = vsyncadd [#allocation4], %s20
      %s22 = sshll.u32 [#allocation3], 4
      %s23 = int_to_ptr.vmem [resolvable:$true] %s22
      %28 = dma.hbm_to_vmem [thread:$0]  %s0, 256, %s23, [#allocation4], 128, 128, 8
    $region5: #{tpu_custom_call.1} parent=1 // pred_fallthru
      _
    // Predicated region
    $region6: #{tpu_custom_call.1} parent=1 // pred_check
      _
    $region7: #{tpu_custom_call.1} parent=1 // pred_check_branch
      %30 = sbr.rel (0) target = $region9
    $region8: #{tpu_custom_call.1} parent=1 // pred_region
      %s32 = ssub.s32 512, 512
      %33 = vsyncadd [#allocation7], %s32
      %s34 = sshll.u32 [#allocation6], 4
      %s35 = int_to_ptr.vmem [resolvable:$true] %s34
      %40 = dma.hbm_to_vmem [thread:$0]  %s1, 512, %s35, [#allocation7], 128, 128, 8
    $region9: #{tpu_custom_call.1} parent=1 // pred_fallthru
      _
    // Predicated region
    $region10: #{tpu_custom_call.1} parent=1 // pred_check
      _
    $region11: #{tpu_custom_call.1} parent=1 // pred_check_branch
      %42 = sbr.rel (0) target = $region13
    $region12: #{tpu_custom_call.1} parent=1 // pred_region
      _
    $region13: #{tpu_custom_call.1} parent=1 // pred_fallthru
      _
    // Predicated region
    $region14: #{tpu_custom_call.1} parent=1 // pred_check
      _
    $region15: #{tpu_custom_call.1} parent=1 // pred_check_branch
      %44 = sbr.rel (0) target = $region17
    $region16: #{tpu_custom_call.1} parent=1 // pred_region
      _
    $region17: #{tpu_custom_call.1} parent=1 // pred_fallthru
      _
    // Predicated region
    $region18: #{tpu_custom_call.1} parent=1 // pred_check
      _
    $region19: #{tpu_custom_call.1} parent=1 // pred_check_branch
      %46 = sbr.rel (0) target = $region21
    $region20: #{tpu_custom_call.1} parent=1 // pred_region
      _
    $region21: #{tpu_custom_call.1} parent=1 // pred_fallthru
      _
    // Predicated region
    $region22: #{tpu_custom_call.1} parent=1 // pred_check
      _
    $region23: #{tpu_custom_call.1} parent=1 // pred_check_branch
      %48 = sbr.rel (0) target = $region25
    $region24: #{tpu_custom_call.1} parent=1 // pred_region
      %49 = dma.done [#allocation4], 256
    $region25: #{tpu_custom_call.1} parent=1 // pred_fallthru
      _
    // Predicated region
    $region26: #{tpu_custom_call.1} parent=1 // pred_check
      _
    $region27: #{tpu_custom_call.1} parent=1 // pred_check_branch
      %51 = sbr.rel (0) target = $region29
    $region28: #{tpu_custom_call.1} parent=1 // pred_region
      %52 = dma.done [#allocation7], 512
    $region29: #{tpu_custom_call.1} parent=1 // pred_fallthru
      _
    %v53 = vld [vmem:[#allocation3] sm:$0xff]
    %v54 = vld [vmem:[#allocation3 + $0x8] sm:$0xff]
    %v55 = vld [vmem:[#allocation6] sm:$0xff]
    %v56 = vld [vmem:[#allocation6 + $0x8] sm:$0xff]
    %v57 = vld [vmem:[#allocation6 + $0x10] sm:$0xff]
    %v58 = vld [vmem:[#allocation6 + $0x18] sm:$0xff]
    %v59 = vld [vmem:[%s2] sm:$0x1]
    %v61 = vlaneseq
    %v62 = vshrl.u32 %v61, 7
    %v63 = vsub.s32 0, %v62
    %v64 = vrot.slane %v59, %v63
    %vm66 = vcmask 261120
    %v68 = vsel %vm66, %v53, 0
    %v71 = vsel %vm66, %v54, 0
    %73 = vmatprep.subr.mxu0 0.0
    %74 = vmatpush1.msra.mxu0 %v55
    %75 = vmatprep.subr.mxu0 0.0
    %76 = vmatpush1.msra.mxu0 %v56
    %77 = vmatprep.subr.mxu0 0.0
    %78 = vmatpush1.msra.mxu0 %v57
    %79 = vmatprep.subr.mxu0 0.0
    %80 = vmatpush1.msra.mxu0 %v58
    %81 = vmatprep.subr.mxu0 0.0
    %82 = vmatpush1.msra.mxu0 0.0
    %83 = vmatprep.subr.mxu0 0.0
    %84 = vmatpush1.msra.mxu0 0.0
    %85 = vmatprep.subr.mxu0 0.0
    %86 = vmatpush1.msra.mxu0 0.0
    %87 = vmatprep.subr.mxu0 0.0
    %88 = vmatpush1.msra.mxu0 0.0
    %89 = vmatprep.subr.mxu0 0.0
    %90 = vmatpush1.msra.mxu0 0.0
    %91 = vmatprep.subr.mxu0 0.0
    %92 = vmatpush1.msra.mxu0 0.0
    %93 = vmatprep.subr.mxu0 0.0
    %94 = vmatpush1.msra.mxu0 0.0
    %95 = vmatprep.subr.mxu0 0.0
    %96 = vmatpush1.msra.mxu0 0.0
    %97 = vmatprep.subr.mxu0 0.0
    %98 = vmatpush1.msra.mxu0 0.0
    %99 = vmatprep.subr.mxu0 0.0
    %100 = vmatpush1.msra.mxu0 0.0
    %101 = vmatprep.subr.mxu0 0.0
    %102 = vmatpush1.msra.mxu0 0.0
    %103 = vmatprep.subr.mxu0 0.0
    %104 = vmatpush1.msra.mxu0 0.0
    %105 = vmatprep.subr.mxu0 0.0
    %106 = vmatpush1.msra.mxu0 0.0
    %107 = vmatprep.subr.mxu0 0.0
    %108 = vmatpush1.msra.mxu0 0.0
    %109 = vmatprep.subr.mxu0 0.0
    %110 = vmatpush1.msra.mxu0 0.0
    %111 = vmatprep.subr.mxu0 0.0
    %112 = vmatpush1.msra.mxu0 0.0
    %113 = vmatprep.subr.mxu0 0.0
    %114 = vmatpush1.msra.mxu0 0.0
    %115 = vmatprep.subr.mxu0 0.0
    %116 = vmatpush1.msra.mxu0 0.0
    %117 = vmatprep.subr.mxu0 0.0
    %118 = vmatpush1.msra.mxu0 0.0
    %119 = vmatprep.subr.mxu0 0.0
    %120 = vmatpush1.msra.mxu0 0.0
    %121 = vmatprep.subr.mxu0 0.0
    %122 = vmatpush1.msra.mxu0 0.0
    %123 = vmatprep.subr.mxu0 0.0
    %124 = vmatpush1.msra.mxu0 0.0
    %125 = vmatprep.subr.mxu0 0.0
    %126 = vmatpush1.msra.mxu0 0.0
    %127 = vmatprep.subr.mxu0 0.0
    %128 = vmatpush1.msra.mxu0 0.0
    %129 = vmatprep.subr.mxu0 0.0
    %130 = vmatpush1.msra.mxu0 0.0
    %131 = vmatprep.subr.mxu0 0.0
    %132 = vmatpush1.msra.mxu0 0.0
    %133 = vmatprep.subr.mxu0 0.0
    %134 = vmatpush1.msra.mxu0 0.0
    %135 = vmatprep.subr.mxu0 0.0
    %136 = vmatpush1.msra.mxu0 0.0
    %137 = vmatprep.mubr.f32.mxu0 0.0
    %138 = vmatmul.mubr.f32.gmra.mrb[0].mxu0 %v68
    %v139 = vpop.f32.mrb[0].mxu0
    %v140 = vadd.f32 %v64, %v139
    %v141 = vpop.f32.mrb[0].mxu0
    %142 = vmatprep.mubr.f32.mxu0 0.0
    %143 = vmatmul.mubr.f32.gmra.mrb[0].mxu0 %v71
    %v144 = vpop.f32.mrb[0].mxu0
    %v145 = vadd.f32 %v64, %v144
    %v146 = vpop.f32.mrb[0].mxu0
    %147 = vdwg.mxu0
    %v148 = vtanh.pop %v140
    %v149 = vtanh.pop %v145
    %v150 = vld [vmem:[%s3] sm:$0x1]
    %v152 = vlaneseq
    %v153 = vshrl.u32 %v152, 7
    %v154 = vsub.s32 0, %v153
    %v155 = vrot.slane %v150, %v154
    %v157 = vmul.f32 %v148, %v155
    %v158 = vmul.f32 %v149, %v155
    %v159 = vsel %vm66, %v157, 0.0
    %160 = vadd.xlane.f32.xlu0 %v159
    %v161 = vpop.xlane.xlu0 %160
    %v162 = vsel %vm66, %v158, 0.0
    %163 = vadd.xlane.f32.xlu0 %v162
    %v164 = vpop.xlane.xlu0 %163
    %s165 = sld [smem:[#allocation2]]
    %v166 = vstv %s165
    %v167 = vadd.f32 %v161, %v166
    %v168 = vadd.f32 %v164, %v166
    %v171 = vlaneseq
    %v172 = vand.u32 %v171, 127
    %v173 = vlaneseq
    %v174 = vshrl.u32 %v173, 7
    %v175 = vsub.s32 %v172, %v174
    %v176 = vrot.slane %v167, %v175
    %v177 = vlaneseq
    %v178 = vshrl.u32 %v177, 7
    %v179 = vsub.s32 %v172, %v178
    %v180 = vrot.slane %v168, %v179
    %vm181 = vcmask 1041409
    %v182 = vsel %vm181, %v180, %v176
    %vm184 = vcmask 58368
    %v185 = vsel %vm184, %v182, -inf
    %186 = vmax.xlane.f32.xlu0 %v185
    %v187 = vpop.xlane.xlu0 %186
    %v189 = vlaneseq
    %v190 = vshrl.u32 %v189, 7
    %v191 = vsub.s32 0, %v190
    %v192 = vrot.slane %v187, %v191
    %v193 = vlaneseq
    %v194 = vshrl.u32 %v193, 7
    %v195 = vsub.s32 1, %v194
    %v196 = vrot.slane %v187, %v195
    %v199 = vsub.f32 %v167, %v192
    %v200 = vsub.f32 %v168, %v196
    %v201 = vmul.f32 %v199, 1.442695
    %v202 = vpow.pop %v201
    %v203 = vmul.f32 %v200, 1.442695
    %v204 = vpow.pop %v203
    %207 = vset.pattern.permute.xlu0 0
    %208 = vperm.xlu0 %207, %v202
    %v209 = vpop.permute.xlu0 %208
    %210 = vset.pattern.permute.xlu0 0
    %211 = vperm.xlu0 %210, %v204
    %v212 = vpop.permute.xlu0 %211
    %v213 = vlaneseq
    %v214 = vshrl.u32 %v213, 7
    %v215 = vsub.s32 %v172, %v214
    %v216 = vrot.slane %v209, %v215
    %v217 = vlaneseq
    %v218 = vshrl.u32 %v217, 7
    %v219 = vsub.s32 %v172, %v218
    %v220 = vrot.slane %v212, %v219
    %v221 = vsel %vm181, %v220, %v216
    %v223 = vsel %vm184, %v221, 0.0
    %224 = vadd.xlane.f32.xlu0 %v223
    %v225 = vpop.xlane.xlu0 %224
    %v226 = vrcp.pop %v225
    %v228 = vlaneseq
    %v229 = vshrl.u32 %v228, 7
    %v230 = vsub.s32 0, %v229
    %v231 = vrot.slane %v226, %v230
    %v232 = vlaneseq
    %v233 = vshrl.u32 %v232, 7
    %v234 = vsub.s32 1, %v233
    %v235 = vrot.slane %v226, %v234
    %v238 = vmul.f32 %v202, %v231
    %v239 = vmul.f32 %v204, %v235
    %241 = vset.pattern.permute.xlu0 0
    %242 = vperm.xlu0 %241, %v238
    %v243 = vpop.permute.xlu0 %242
    %246 = vset.pattern.permute.xlu0 0
    %247 = vperm.xlu0 %246, %v239
    %v248 = vpop.permute.xlu0 %247
    %v250 = vmul.f32 %v243, %v53
    %v251 = vmul.f32 %v248, %v54
    %252 = vst.msk [vmem:[#allocation8] sm:$0xff] %vm66, %v250
    %253 = vst.msk [vmem:[#allocation8 + $0x8] sm:$0xff] %vm66, %v251
    %v254 = vlaneseq
    %v255 = vshrl.u32 %v254, 7
    %v256 = vsub.s32 %v172, %v255
    %v257 = vrot.slane %v243, %v256
    %v258 = vlaneseq
    %v259 = vshrl.u32 %v258, 7
    %v260 = vsub.s32 %v172, %v259
    %v261 = vrot.slane %v248, %v260
    %vm264 = vcmask 57344
    %265 = vst.msk [vmem:[#allocation9] sm:$0x1] %vm264, %v257
    %266 = vst.msk [vmem:[#allocation9 + $0x1] sm:$0x1] %vm264, %v261
    // Predicated region
    $region30: #{tpu_custom_call.1} parent=1 // pred_check
      _
    $region31: #{tpu_custom_call.1} parent=1 // pred_check_branch
      %268 = sbr.rel (0) target = $region33
    $region32: #{tpu_custom_call.1} parent=1 // pred_region
      %s270 = ssub.s32 256, 256
      %271 = vsyncadd [#allocation5], %s270
      %s272 = sshll.u32 [#allocation8], 4
      %s273 = int_to_ptr.vmem [resolvable:$true] %s272
      %278 = dma.vmem_to_hbm [thread:$0]  %s273, 256, %s5, [#allocation5], 128, 128, 8
    $region33: #{tpu_custom_call.1} parent=1 // pred_fallthru
      _
    // Predicated region
    $region34: #{tpu_custom_call.1} parent=1 // pred_check
      _
    $region35: #{tpu_custom_call.1} parent=1 // pred_check_branch
      %280 = sbr.rel (0) target = $region37
    $region36: #{tpu_custom_call.1} parent=1 // pred_region
      %s282 = ssub.s32 32, 32
      %283 = vsyncadd [#allocation10], %s282
      %s284 = sshll.u32 [#allocation9], 4
      %s285 = int_to_ptr.vmem [resolvable:$true] %s284
      %290 = dma.vmem_to_hbm [thread:$0]  %s285, 32, %s6, [#allocation10], 16, 16, 1
    $region37: #{tpu_custom_call.1} parent=1 // pred_fallthru
      _
    // Predicated region
    $region38: #{tpu_custom_call.1} parent=1 // pred_check
      _
    $region39: #{tpu_custom_call.1} parent=1 // pred_check_branch
      %292 = sbr.rel (0) target = $region41
    $region40: #{tpu_custom_call.1} parent=1 // pred_region
      %293 = dma.done [#allocation5], 256
    $region41: #{tpu_custom_call.1} parent=1 // pred_fallthru
      _
    // Predicated region
    $region42: #{tpu_custom_call.1} parent=1 // pred_check
      _
    $region43: #{tpu_custom_call.1} parent=1 // pred_check_branch
      %295 = sbr.rel (0) target = $region45
    $region44: #{tpu_custom_call.1} parent=1 // pred_region
      %296 = dma.done [#allocation10], 32
    $region45: #{tpu_custom_call.1} parent=1 // pred_fallthru
      _
    %297 = vsyncpa [#allocation4], 1
    %298 = vsyncpa [#allocation7], 1
    %299 = vsyncpa [#allocation5], 1
    %300 = vsyncpa [#allocation10], 1

// kernel: tpu_custom_call.1
$region0: #{tpu_custom_call.1}
  #allocation0 [shape = 'u32[]', space=smem, size = 0x4, offset = 0x4, fixed_abs, tag = 'smem constant byte address 0x4 - core index']
  #allocation1 [shape = 'u32[144,128]{1,0:T(1,128)}', space=vmem, size = 0x12000, scoped, tag = 'internal scratch']
  #allocation2 [shape = 'f32[1]{0:T(128)S(6)}', space=smem, size = 0x200, scoped, tag = 'scoped memory for tpu_custom_call.1']
  %s0 = inlined_call_operand.hbm [shape: f32[2,8,32], index: 0, kind: input, shape index: {}]
  %s1 = inlined_call_operand.hbm [shape: f32[32,32], index: 1, kind: input, shape index: {}]
  %s2 = inlined_call_operand.vmem [shape: f32[1,32], index: 2, kind: input, shape index: {}]
  %s3 = inlined_call_operand.vmem [shape: f32[1,32], index: 3, kind: input, shape index: {}]
  %s4 = inlined_call_operand.<no memory space> [shape: f32[1], index: 4, kind: input, shape index: {}]
  %s5 = inlined_call_operand.hbm [shape: f32[2,8,32], index: 5, kind: output, shape index: {0}]
  %s6 = inlined_call_operand.hbm [shape: f32[2,1,8], index: 6, kind: output, shape index: {1}]
  %7 = xla_tuple %s5, %s6
  %s8 = sld [smem:[#allocation0]]
  $region46: #{tpu_custom_call.1} parent=0
    _
  %s10 = ssub.s32 1, %s8
  %s11 = scalar_select 0, %s10, %s8
  %12 = sst [smem:[#allocation2]] %s4
  $region1: #{tpu_custom_call.1} parent=0
    #allocation3 [shape = 'u8[8192]{0}', space=vmem, size = 0x2000, scoped, tag = 'input window, operand 0, single buffered']
    #allocation4 [shape = 's32[1]{0}', space=sflag, size = 0x4, scoped, tag = 'scoped memory for tpu_custom_call.1']
    #allocation5 [shape = 's32[1]{0}', space=sflag, size = 0x4, scoped, tag = 'scoped memory for tpu_custom_call.1']
    #allocation6 [shape = 'u8[16384]{0}', space=vmem, size = 0x4000, scoped, tag = 'input window, operand 1, single buffered']
    #allocation7 [shape = 's32[1]{0}', space=sflag, size = 0x4, scoped, tag = 'scoped memory for tpu_custom_call.1']
    #allocation8 [shape = 'u8[8192]{0}', space=vmem, size = 0x2000, scoped, tag = 'output window, operand 0, single buffered']
    #allocation9 [shape = 'u8[1024]{0}', space=vmem, size = 0x400, scoped, tag = 'output window, operand 1, single buffered']
    #allocation10 [shape = 's32[1]{0}', space=sflag, size = 0x4, scoped, tag = 'scoped memory for tpu_custom_call.1']
    %13 = vsyncpa [#allocation4], 0
    %14 = vsyncpa [#allocation7], 0
    %15 = vsyncpa [#allocation5], 0
    %16 = vsyncpa [#allocation10], 0
    // Predicated region
    $region2: #{tpu_custom_call.1} parent=1 // pred_check
      _
    $region3: #{tpu_custom_call.1} parent=1 // pred_check_branch
      %18 = sbr.rel (0) target = $region5
    $region4: #{tpu_custom_call.1} parent=1 // pred_region
      %s20 = ssub.s32 256, 256
      %21 = vsyncadd [#allocation4], %s20
      %s22 = sshll.u32 [#allocation3], 4
      %s23 = int_to_ptr.vmem [resolvable:$true] %s22
      %28 = dma.hbm_to_vmem [thread:$0]  %s0, 256, %s23, [#allocation4], 128, 128, 8
    $region5: #{tpu_custom_call.1} parent=1 // pred_fallthru
      _
    // Predicated region
    $region6: #{tpu_custom_call.1} parent=1 // pred_check
      _
    $region7: #{tpu_custom_call.1} parent=1 // pred_check_branch
      %30 = sbr.rel (0) target = $region9
    $region8: #{tpu_custom_call.1} parent=1 // pred_region
      %s32 = ssub.s32 512, 512
      %33 = vsyncadd [#allocation7], %s32
      %s34 = sshll.u32 [#allocation6], 4
      %s35 = int_to_ptr.vmem [resolvable:$true] %s34
      %40 = dma.hbm_to_vmem [thread:$0]  %s1, 512, %s35, [#allocation7], 128, 128, 8
    $region9: #{tpu_custom_call.1} parent=1 // pred_fallthru
      _
    // Predicated region
    $region10: #{tpu_custom_call.1} parent=1 // pred_check
      _
    $region11: #{tpu_custom_call.1} parent=1 // pred_check_branch
      %42 = sbr.rel (0) target = $region13
    $region12: #{tpu_custom_call.1} parent=1 // pred_region
      _
    $region13: #{tpu_custom_call.1} parent=1 // pred_fallthru
      _
    // Predicated region
    $region14: #{tpu_custom_call.1} parent=1 // pred_check
      _
    $region15: #{tpu_custom_call.1} parent=1 // pred_check_branch
      %44 = sbr.rel (0) target = $region17
    $region16: #{tpu_custom_call.1} parent=1 // pred_region
      _
    $region17: #{tpu_custom_call.1} parent=1 // pred_fallthru
      _
    // Predicated region
    $region18: #{tpu_custom_call.1} parent=1 // pred_check
      _
    $region19: #{tpu_custom_call.1} parent=1 // pred_check_branch
      %46 = sbr.rel (0) target = $region21
    $region20: #{tpu_custom_call.1} parent=1 // pred_region
      _
    $region21: #{tpu_custom_call.1} parent=1 // pred_fallthru
      _
    // Predicated region
    $region22: #{tpu_custom_call.1} parent=1 // pred_check
      _
    $region23: #{tpu_custom_call.1} parent=1 // pred_check_branch
      %48 = sbr.rel (0) target = $region25
    $region24: #{tpu_custom_call.1} parent=1 // pred_region
      %49 = dma.done [#allocation4], 256
    $region25: #{tpu_custom_call.1} parent=1 // pred_fallthru
      _
    // Predicated region
    $region26: #{tpu_custom_call.1} parent=1 // pred_check
      _
    $region27: #{tpu_custom_call.1} parent=1 // pred_check_branch
      %51 = sbr.rel (0) target = $region29
    $region28: #{tpu_custom_call.1} parent=1 // pred_region
      %52 = dma.done [#allocation7], 512
    $region29: #{tpu_custom_call.1} parent=1 // pred_fallthru
      _
    %v53 = vld [vmem:[#allocation3] sm:$0xff]
    %v54 = vld [vmem:[#allocation3 + $0x8] sm:$0xff]
    %v55 = vld [vmem:[#allocation6] sm:$0xff]
    %v56 = vld [vmem:[#allocation6 + $0x8] sm:$0xff]
    %v57 = vld [vmem:[#allocation6 + $0x10] sm:$0xff]
    %v58 = vld [vmem:[#allocation6 + $0x18] sm:$0xff]
    %v59 = vld [vmem:[%s2] sm:$0x1]
    %v61 = vlaneseq
    %v62 = vshrl.u32 %v61, 7
    %v63 = vsub.s32 0, %v62
    %v64 = vrot.slane %v59, %v63
    %vm66 = vcmask 261120
    %v68 = vsel %vm66, %v53, 0
    %v71 = vsel %vm66, %v54, 0
    %73 = vmatprep.subr.mxu0 0.0
    %74 = vmatpush1.msra.mxu0 %v55
    %75 = vmatprep.subr.mxu0 0.0
    %76 = vmatpush1.msra.mxu0 %v56
    %77 = vmatprep.subr.mxu0 0.0
    %78 = vmatpush1.msra.mxu0 %v57
    %79 = vmatprep.subr.mxu0 0.0
    %80 = vmatpush1.msra.mxu0 %v58
    %81 = vmatprep.subr.mxu0 0.0
    %82 = vmatpush1.msra.mxu0 0.0
    %83 = vmatprep.subr.mxu0 0.0
    %84 = vmatpush1.msra.mxu0 0.0
    %85 = vmatprep.subr.mxu0 0.0
    %86 = vmatpush1.msra.mxu0 0.0
    %87 = vmatprep.subr.mxu0 0.0
    %88 = vmatpush1.msra.mxu0 0.0
    %89 = vmatprep.subr.mxu0 0.0
    %90 = vmatpush1.msra.mxu0 0.0
    %91 = vmatprep.subr.mxu0 0.0
    %92 = vmatpush1.msra.mxu0 0.0
    %93 = vmatprep.subr.mxu0 0.0
    %94 = vmatpush1.msra.mxu0 0.0
    %95 = vmatprep.subr.mxu0 0.0
    %96 = vmatpush1.msra.mxu0 0.0
    %97 = vmatprep.subr.mxu0 0.0
    %98 = vmatpush1.msra.mxu0 0.0
    %99 = vmatprep.subr.mxu0 0.0
    %100 = vmatpush1.msra.mxu0 0.0
    %101 = vmatprep.subr.mxu0 0.0
    %102 = vmatpush1.msra.mxu0 0.0
    %103 = vmatprep.subr.mxu0 0.0
    %104 = vmatpush1.msra.mxu0 0.0
    %105 = vmatprep.subr.mxu0 0.0
    %106 = vmatpush1.msra.mxu0 0.0
    %107 = vmatprep.subr.mxu0 0.0
    %108 = vmatpush1.msra.mxu0 0.0
    %109 = vmatprep.subr.mxu0 0.0
    %110 = vmatpush1.msra.mxu0 0.0
    %111 = vmatprep.subr.mxu0 0.0
    %112 = vmatpush1.msra.mxu0 0.0
    %113 = vmatprep.subr.mxu0 0.0
    %114 = vmatpush1.msra.mxu0 0.0
    %115 = vmatprep.subr.mxu0 0.0
    %116 = vmatpush1.msra.mxu0 0.0
    %117 = vmatprep.subr.mxu0 0.0
    %118 = vmatpush1.msra.mxu0 0.0
    %119 = vmatprep.subr.mxu0 0.0
    %120 = vmatpush1.msra.mxu0 0.0
    %121 = vmatprep.subr.mxu0 0.0
    %122 = vmatpush1.msra.mxu0 0.0
    %123 = vmatprep.subr.mxu0 0.0
    %124 = vmatpush1.msra.mxu0 0.0
    %125 = vmatprep.subr.mxu0 0.0
    %126 = vmatpush1.msra.mxu0 0.0
    %127 = vmatprep.subr.mxu0 0.0
    %128 = vmatpush1.msra.mxu0 0.0
    %129 = vmatprep.subr.mxu0 0.0
    %130 = vmatpush1.msra.mxu0 0.0
    %131 = vmatprep.subr.mxu0 0.0
    %132 = vmatpush1.msra.mxu0 0.0
    %133 = vmatprep.subr.mxu0 0.0
    %134 = vmatpush1.msra.mxu0 0.0
    %135 = vmatprep.subr.mxu0 0.0
    %136 = vmatpush1.msra.mxu0 0.0
    %137 = vmatprep.mubr.f32.mxu0 0.0
    %138 = vmatmul.mubr.f32.gmra.mrb[0].mxu0 %v68
    %v139 = vpop.f32.mrb[0].mxu0
    %v140 = vadd.f32 %v64, %v139
    %v141 = vpop.f32.mrb[0].mxu0
    %142 = vmatprep.mubr.f32.mxu0 0.0
    %143 = vmatmul.mubr.f32.gmra.mrb[0].mxu0 %v71
    %v144 = vpop.f32.mrb[0].mxu0
    %v145 = vadd.f32 %v64, %v144
    %v146 = vpop.f32.mrb[0].mxu0
    %147 = vdwg.mxu0
    %v148 = vtanh.pop %v140
    %v149 = vtanh.pop %v145
    %v150 = vld [vmem:[%s3] sm:$0x1]
    %v152 = vlaneseq
    %v153 = vshrl.u32 %v152, 7
    %v154 = vsub.s32 0, %v153
    %v155 = vrot.slane %v150, %v154
    %v157 = vmul.f32 %v148, %v155
    %v158 = vmul.f32 %v149, %v155
    %v159 = vsel %vm66, %v157, 0.0
    %160 = vadd.xlane.f32.xlu0 %v159
    %v161 = vpop.xlane.xlu0 %160
    %v162 = vsel %vm66, %v158, 0.0
    %163 = vadd.xlane.f32.xlu0 %v162
    %v164 = vpop.xlane.xlu0 %163
    %s165 = sld [smem:[#allocation2]]
    %v166 = vstv %s165
    %v167 = vadd.f32 %v161, %v166
    %v168 = vadd.f32 %v164, %v166
    %v171 = vlaneseq
    %v172 = vand.u32 %v171, 127
    %v173 = vlaneseq
    %v174 = vshrl.u32 %v173, 7
    %v175 = vsub.s32 %v172, %v174
    %v176 = vrot.slane %v167, %v175
    %v177 = vlaneseq
    %v178 = vshrl.u32 %v177, 7
    %v179 = vsub.s32 %v172, %v178
    %v180 = vrot.slane %v168, %v179
    %vm181 = vcmask 1041409
    %v182 = vsel %vm181, %v180, %v176
    %vm184 = vcmask 58368
    %v185 = vsel %vm184, %v182, -inf
    %186 = vmax.xlane.f32.xlu0 %v185
    %v187 = vpop.xlane.xlu0 %186
    %v189 = vlaneseq
    %v190 = vshrl.u32 %v189, 7
    %v191 = vsub.s32 0, %v190
    %v192 = vrot.slane %v187, %v191
    %v193 = vlaneseq
    %v194 = vshrl.u32 %v193, 7
    %v195 = vsub.s32 1, %v194
    %v196 = vrot.slane %v187, %v195
    %v199 = vsub.f32 %v167, %v192
    %v200 = vsub.f32 %v168, %v196
    %v201 = vmul.f32 %v199, 1.442695
    %v202 = vpow.pop %v201
    %v203 = vmul.f32 %v200, 1.442695
    %v204 = vpow.pop %v203
    %207 = vset.pattern.permute.xlu0 0
    %208 = vperm.xlu0 %207, %v202
    %v209 = vpop.permute.xlu0 %208
    %210 = vset.pattern.permute.xlu0 0
    %211 = vperm.xlu0 %210, %v204
    %v212 = vpop.permute.xlu0 %211
    %v213 = vlaneseq
    %v214 = vshrl.u32 %v213, 7
    %v215 = vsub.s32 %v172, %v214
    %v216 = vrot.slane %v209, %v215
    %v217 = vlaneseq
    %v218 = vshrl.u32 %v217, 7
    %v219 = vsub.s32 %v172, %v218
    %v220 = vrot.slane %v212, %v219
    %v221 = vsel %vm181, %v220, %v216
    %v223 = vsel %vm184, %v221, 0.0
    %224 = vadd.xlane.f32.xlu0 %v223
    %v225 = vpop.xlane.xlu0 %224
    %v226 = vrcp.pop %v225
    %v228 = vlaneseq
    %v229 = vshrl.u32 %v228, 7
    %v230 = vsub.s32 0, %v229
    %v231 = vrot.slane %v226, %v230
    %v232 = vlaneseq
    %v233 = vshrl.u32 %v232, 7
    %v234 = vsub.s32 1, %v233
    %v235 = vrot.slane %v226, %v234
    %v238 = vmul.f32 %v202, %v231
    %v239 = vmul.f32 %v204, %v235
    %241 = vset.pattern.permute.xlu0 0
    %242 = vperm.xlu0 %241, %v238
    %v243 = vpop.permute.xlu0 %242
    %246 = vset.pattern.permute.xlu0 0
    %247 = vperm.xlu0 %246, %v239
    %v248 = vpop.permute.xlu0 %247
    %v250 = vmul.f32 %v243, %v53
    %v251 = vmul.f32 %v248, %v54
    %252 = vst.msk [vmem:[#allocation8] sm:$0xff] %vm66, %v250
    %253 = vst.msk [vmem:[#allocation8 + $0x8] sm:$0xff] %vm66, %v251
    %v254 = vlaneseq
    %v255 = vshrl.u32 %v254, 7
    %v256 = vsub.s32 %v172, %v255
    %v257 = vrot.slane %v243, %v256
    %v258 = vlaneseq
    %v259 = vshrl.u32 %v258, 7
    %v260 = vsub.s32 %v172, %v259
    %v261 = vrot.slane %v248, %v260
    %vm264 = vcmask 57344
    %265 = vst.msk [vmem:[#allocation9] sm:$0x1] %vm264, %v257
    %266 = vst.msk [vmem:[#allocation9 + $0x1] sm:$0x1] %vm264, %v261
    // Predicated region
    $region30: #{tpu_custom_call.1} parent=1 // pred_check
      _
    $region31: #{tpu_custom_call.1} parent=1 // pred_check_branch
      %268 = sbr.rel (0) target = $region33
    $region32: #{tpu_custom_call.1} parent=1 // pred_region
      %s270 = ssub.s32 256, 256
      %271 = vsyncadd [#allocation5], %s270
      %s272 = sshll.u32 [#allocation8], 4
      %s273 = int_to_ptr.vmem [resolvable:$true] %s272
      %278 = dma.vmem_to_hbm [thread:$0]  %s273, 256, %s5, [#allocation5], 128, 128, 8
    $region33: #{tpu_custom_call.1} parent=1 // pred_fallthru
      _
    // Predicated region
    $region34: #{tpu_custom_call.1} parent=1 // pred_check
      _
    $region35: #{tpu_custom_call.1} parent=1 // pred_check_branch
      %280 = sbr.rel (0) target = $region37
    $region36: #{tpu_custom_call.1} parent=1 // pred_region
      %s282 = ssub.s32 32, 32
      %283 = vsyncadd [#allocation10], %s282
      %s284 = sshll.u32 [#allocation9], 4
      %s285 = int_to_ptr.vmem [resolvable:$true] %s284
      %290 = dma.vmem_to_hbm [thread:$0]  %s285, 32, %s6, [#allocation10], 16, 16, 1
    $region37: #{tpu_custom_call.1} parent=1 // pred_fallthru
      _
    // Predicated region
    $region38: #{tpu_custom_call.1} parent=1 // pred_check
      _
    $region39: #{tpu_custom_call.1} parent=1 // pred_check_branch
      %292 = sbr.rel (0) target = $region41
    $region40: #{tpu_custom_call.1} parent=1 // pred_region
      %293 = dma.done [#allocation5], 256
    $region41: #{tpu_custom_call.1} parent=1 // pred_fallthru
      _
    // Predicated region
    $region42: #{tpu_custom_call.1} parent=1 // pred_check
      _
    $region43: #{tpu_custom_call.1} parent=1 // pred_check_branch
      %295 = sbr.rel (0) target = $region45
    $region44: #{tpu_custom_call.1} parent=1 // pred_region
      %296 = dma.done [#allocation10], 32
    $region45: #{tpu_custom_call.1} parent=1 // pred_fallthru
      _
    %297 = vsyncpa [#allocation4], 1
    %298 = vsyncpa [#allocation7], 1
    %299 = vsyncpa [#allocation5], 1
    %300 = vsyncpa [#allocation10], 1

</llo_original>
